<compile_context>
chip_gen: v7x
topology: tpu7x:2x2x1
jax: 0.10.0
libtpu: 0.0.40
codegen_flags: <defaults>
</compile_context>

<pallas_src>
import math
from functools import partial

import numpy as np
import jax
import jax.numpy as jnp
from jax.experimental import pallas as pl
from jax.experimental.pallas import tpu as pltpu


def _build_dft_matrices(a, b):
    """Real matrices implementing ortho rfft2 / irfft2 over an (a, b) grid.

    Spatial index flattened row-major (mn = m*b + n); frequency index
    kf = k*(b//2+1) + f.  Inverse matrices reproduce numpy/torch irfft2
    semantics (Hermitian reconstruction, imag of DC/Nyquist bins dropped).
    Returns numpy float32: (mfr, mfi) of shape (K, N), (mir, mii) of (N, K).
    """
    wf = b // 2 + 1
    k = np.arange(a)[:, None, None, None]
    f = np.arange(wf)[None, :, None, None]
    m = np.arange(a)[None, None, :, None]
    n = np.arange(b)[None, None, None, :]
    phase = 2.0 * np.pi * (k * m / a + f * n / b)            # (a, wf, a, b)
    scale = 1.0 / math.sqrt(a * b)
    # forward: Y[kf] = (1/sqrt(ab)) * sum_mn exp(-i*phase) x[mn]
    mfr = (np.cos(phase) * scale).reshape(a * wf, a * b).astype(np.float32)
    mfi = (-np.sin(phase) * scale).reshape(a * wf, a * b).astype(np.float32)
    # inverse: out[mn] = sum_kf c_f*(cos*Re - sin*Im)/sqrt(ab), c_f=2 except DC/Nyquist
    fidx = np.arange(wf)
    c = np.where((fidx == 0) | ((b % 2 == 0) & (fidx == b // 2)), 1.0, 2.0)
    c = c[None, :, None, None]
    mir = (np.cos(phase) * c * scale).transpose(2, 3, 0, 1).reshape(a * b, a * wf)
    mii = (-np.sin(phase) * c * scale).transpose(2, 3, 0, 1).reshape(a * b, a * wf)
    return mfr, mfi, mir.astype(np.float32), mii.astype(np.float32)


def _sgn_kernel(K, BT, x_ref, fwd_ref, inv_ref, wa_ref, wb_ref, o_ref):
    # Hoist constant reads out of the per-batch loop.
    fwd = fwd_ref[...]                                        # (2K, N) bf16
    inv = inv_ref[...]                                        # (N, 2K) bf16
    wa = wa_ref[...]                                          # (2K, C) f32  [wr; wr]
    wb = wb_ref[...]                                          # (2K, C) f32  [-wi; wi]
    # BT is small (<= ~16); trace-time unrolled independent matmuls.
    for t in range(BT):
        xt = x_ref[t].astype(jnp.bfloat16)                    # (N, C), cast in-kernel
        # fused forward rfft2 (ortho): one bf16 MXU matmul -> [yr; yi] in f32
        y = jnp.dot(fwd, xt, preferred_element_type=jnp.float32)     # (2K, C)
        # complex spectral gate (VPU):
        #   [gr; gi] = [yr; yi]*[wr; wr] + [yi; yr]*[-wi; wi]
        y_sw = pltpu.roll(y, shift=K, axis=0)                 # [yi; yr] (XLU)
        g = y * wa + y_sw * wb                                 # (2K, C) f32
        # fused inverse irfft2 (ortho): one bf16 MXU matmul back to real space
        o_ref[t] = jnp.dot(inv, g.astype(jnp.bfloat16),
                           preferred_element_type=jnp.float32).astype(o_ref.dtype)


def _pick_batch_block(B, C, cols_target=512):
    """Batches fused per grid step.

    Targets ~cols_target fused (batch x channel) columns of work per step to
    amortise the ~0.35us fixed grid-step overhead, keeps >= 2 grid steps when
    the batch allows it (v7x has 2 TensorCores sharded via "parallel"), and
    requires BT | B so no batch-padding HBM pass is ever needed.
    """
    want = 1 if C >= cols_target else -(-cols_target // C)
    if B >= 2:
        want = min(want, -(-B // 2))        # keep G >= 2 for v7x megacore
    want = max(1, min(want, B))
    for d in range(want, 0, -1):            # largest divisor of B <= want
        if B % d == 0:
            return d
    return 1


def spectral_gating_network(x, complex_weight, spatial_size=None,
                            out_dtype=jnp.float32):
    """Pallas TPU implementation of SpectralGatingNetwork.forward.

    x: (B, N, C); complex_weight: (a, b//2+1, C, 2) float32.
    Returns (B, N, C) in out_dtype (float32 by default, matching PyTorch).
    """
    B, N, C = x.shape
    if spatial_size is None:
        a = b = int(math.sqrt(N))
        assert a * b == N, "N must be a perfect square when spatial_size is None"
    else:
        a, b = spatial_size
        assert a * b == N, "spatial_size must multiply to N"
    wf = b // 2 + 1
    K = a * wf
    assert complex_weight.shape == (a, wf, C, 2)

    BT = _pick_batch_block(B, C)
    G = B // BT

    # ---- constant operands (built once on host) -----------------------------
    mfr, mfi, mir, mii = _build_dft_matrices(a, b)
    fwd = jnp.asarray(np.concatenate([mfr, mfi], axis=0), jnp.bfloat16)   # (2K, N)
    inv = jnp.asarray(np.concatenate([mir, mii], axis=1), jnp.bfloat16)   # (N, 2K)

    wr = complex_weight[..., 0].reshape(K, C).astype(jnp.float32)
    wi = complex_weight[..., 1].reshape(K, C).astype(jnp.float32)
    wa = jnp.concatenate([wr, wr], axis=0)                                # (2K, C)
    wb = jnp.concatenate([-wi, wi], axis=0)                               # (2K, C)

    # ---- explicit scoped-VMEM limit (v5e default is only 16 MiB) ------------
    in_block = BT * N * C * jnp.dtype(x.dtype).itemsize
    out_block = BT * N * C * jnp.dtype(out_dtype).itemsize
    const_bytes = 2 * (2 * K * N * 2) + 2 * (2 * K * C * 4)
    est = 2 * (in_block + out_block) + const_bytes            # double-buffered I/O
    vmem_limit = int(min(64 << 20, max(32 << 20, 2 * est)))

    def const(shp):
        return pl.BlockSpec(shp, lambda i: (0,) * len(shp))

    out = pl.pallas_call(
        partial(_sgn_kernel, K, BT),
        out_shape=jax.ShapeDtypeStruct((B, N, C), out_dtype),
        grid=(G,),
        in_specs=[
            pl.BlockSpec((BT, N, C), lambda i: (i, 0, 0)),    # x, BT batches / step
            const((2 * K, N)),                                # fused forward DFT
            const((N, 2 * K)),                                # fused inverse DFT
            const((2 * K, C)),                                # gate weight [wr; wr]
            const((2 * K, C)),                                # gate weight [-wi; wi]
        ],
        out_specs=pl.BlockSpec((BT, N, C), lambda i: (i, 0, 0)),
        compiler_params=pltpu.CompilerParams(
            dimension_semantics=("parallel",),
            vmem_limit_bytes=vmem_limit,
        ),
    )(x, fwd, inv, wa, wb)
    return out


if __name__ == "__main__":
    B, C = 2, 32
    a = b = 8
    N = a * b
    wf = b // 2 + 1

    key = jax.random.PRNGKey(0)
    kx, kw = jax.random.split(key)
    x = jax.random.normal(kx, (B, N, C), dtype=jnp.float32)
    # deterministic synthetic parameter, matching torch.randn(h, w, dim, 2) * 0.02
    complex_weight = 0.02 * jax.random.normal(kw, (a, wf, C, 2), dtype=jnp.float32)

    out = spectral_gating_network(x, complex_weight)
    out = jax.block_until_ready(out)

    # reference (same semantics as the PyTorch module) via jnp.fft in float32
    xr = x.reshape(B, a, b, C).astype(jnp.float32)
    w_complex = complex_weight[..., 0] + 1j * complex_weight[..., 1]
    ref = jnp.fft.irfft2(
        jnp.fft.rfft2(xr, axes=(1, 2), norm="ortho") * w_complex,
        s=(a, b), axes=(1, 2), norm="ortho",
    ).reshape(B, N, C)

    assert out.shape == (B, N, C)
    # bf16 DFT matrices / bf16-cast inputs with f32 accumulation -> relaxed tolerance
    np.testing.assert_allclose(np.asarray(out), np.asarray(ref), atol=3e-3, rtol=3e-2)
    print("KERNEL_OK")
</pallas_src>

<mosaic_0001>
module attributes {stable_mosaic.version = 11 : i64} {
  func.func @_sgn_kernel(%arg0: i32, %arg1: memref<1x64x32xf32, #tpu.memory_space<vmem>>, %arg2: memref<80x64xbf16, #tpu.memory_space<vmem>>, %arg3: memref<64x80xbf16, #tpu.memory_space<vmem>>, %arg4: memref<80x32xf32, #tpu.memory_space<vmem>>, %arg5: memref<80x32xf32, #tpu.memory_space<vmem>>, %arg6: memref<1x64x32xf32, #tpu.memory_space<vmem>>) attributes {dimension_semantics = [#tpu.dimension_semantics<parallel>], iteration_bounds = array<i64: 2>, scalar_prefetch = 0 : i64, scratch_operands = 0 : i64, tpu.core_type = #tpu.core_type<tc>, window_params = [{transform_indices = @transform_0, window_bounds = array<i64: 1, 64, 32>}, {pipeline_mode = #tpu.pipeline_mode<synchronous>, transform_indices = @transform_1, window_bounds = array<i64: 80, 64>}, {pipeline_mode = #tpu.pipeline_mode<synchronous>, transform_indices = @transform_2, window_bounds = array<i64: 64, 80>}, {pipeline_mode = #tpu.pipeline_mode<synchronous>, transform_indices = @transform_3, window_bounds = array<i64: 80, 32>}, {pipeline_mode = #tpu.pipeline_mode<synchronous>, transform_indices = @transform_4, window_bounds = array<i64: 80, 32>}, {transform_indices = @transform_5, window_bounds = array<i64: 1, 64, 32>}]} {
    %c0 = arith.constant 0 : index
    %c0_0 = arith.constant 0 : index
    %0 = vector.load %arg2[%c0, %c0_0] : memref<80x64xbf16, #tpu.memory_space<vmem>>, vector<80x64xbf16>
    %c0_1 = arith.constant 0 : index
    %c0_2 = arith.constant 0 : index
    %1 = vector.load %arg3[%c0_1, %c0_2] : memref<64x80xbf16, #tpu.memory_space<vmem>>, vector<64x80xbf16>
    %c0_3 = arith.constant 0 : index
    %c0_4 = arith.constant 0 : index
    %2 = vector.load %arg4[%c0_3, %c0_4] : memref<80x32xf32, #tpu.memory_space<vmem>>, vector<80x32xf32>
    %c0_5 = arith.constant 0 : index
    %c0_6 = arith.constant 0 : index
    %3 = vector.load %arg5[%c0_5, %c0_6] : memref<80x32xf32, #tpu.memory_space<vmem>>, vector<80x32xf32>
    %c0_7 = arith.constant 0 : index
    %c0_8 = arith.constant 0 : index
    %c0_9 = arith.constant 0 : index
    %4 = vector.load %arg1[%c0_7, %c0_8, %c0_9] : memref<1x64x32xf32, #tpu.memory_space<vmem>>, vector<1x64x32xf32>
    %5 = vector.shape_cast %4 : vector<1x64x32xf32> to vector<64x32xf32>
    %6 = arith.truncf %5 : vector<64x32xf32> to vector<64x32xbf16>
    %cst = arith.constant dense<0.000000e+00> : vector<80x32xf32>
    %7 = tpu.matmul %0, %6, %cst {dimension_numbers = #tpu.dot_dimension_numbers<[1], [0], [0], [1], [0, 0, 1, 1], [], []>} : vector<80x64xbf16>, vector<64x32xbf16>, vector<80x32xf32> -> vector<80x32xf32>
    %c40_i32 = arith.constant 40 : i32
    %8 = tpu.dynamic_rotate %7 by %c40_i32 dim 0 : vector<80x32xf32>, i32 -> vector<80x32xf32>
    %9 = arith.mulf %7, %2 : vector<80x32xf32>
    %10 = arith.mulf %8, %3 : vector<80x32xf32>
    %11 = arith.addf %9, %10 : vector<80x32xf32>
    %12 = arith.truncf %11 : vector<80x32xf32> to vector<80x32xbf16>
    %cst_10 = arith.constant dense<0.000000e+00> : vector<64x32xf32>
    %13 = tpu.matmul %1, %12, %cst_10 {dimension_numbers = #tpu.dot_dimension_numbers<[1], [0], [0], [1], [0, 0, 1, 1], [], []>} : vector<64x80xbf16>, vector<80x32xbf16>, vector<64x32xf32> -> vector<64x32xf32>
    %c0_11 = arith.constant 0 : index
    %c0_12 = arith.constant 0 : index
    %c0_13 = arith.constant 0 : index
    %14 = vector.load %arg6[%c0_11, %c0_12, %c0_13] : memref<1x64x32xf32, #tpu.memory_space<vmem>>, vector<1x64x32xf32>
    %15 = vector.shape_cast %14 : vector<1x64x32xf32> to vector<64x32xf32>
    %16 = vector.shape_cast %13 : vector<64x32xf32> to vector<1x64x32xf32>
    tpu.vector_store %arg6[%c0_11, %c0_12, %c0_13], %16 {strides = array<i32>} : memref<1x64x32xf32, #tpu.memory_space<vmem>>, vector<1x64x32xf32>,
    return
  }
  func.func @transform_0(%arg0: i32) -> (i32, i32, i32) {
    %c0_i32 = arith.constant 0 : i32
    %c0_i32_0 = arith.constant 0 : i32
    %c0_i32_1 = arith.constant 0 : i32
    return %arg0, %c0_i32, %c0_i32_0 : i32, i32, i32
  }
  func.func @transform_1(%arg0: i32) -> (i32, i32) {
    %c0_i32 = arith.constant 0 : i32
    %c0_i32_0 = arith.constant 0 : i32
    %c0_i32_1 = arith.constant 0 : i32
    return %c0_i32, %c0_i32_0 : i32, i32
  }
  func.func @transform_2(%arg0: i32) -> (i32, i32) {
    %c0_i32 = arith.constant 0 : i32
    %c0_i32_0 = arith.constant 0 : i32
    %c0_i32_1 = arith.constant 0 : i32
    return %c0_i32, %c0_i32_0 : i32, i32
  }
  func.func @transform_3(%arg0: i32) -> (i32, i32) {
    %c0_i32 = arith.constant 0 : i32
    %c0_i32_0 = arith.constant 0 : i32
    %c0_i32_1 = arith.constant 0 : i32
    return %c0_i32, %c0_i32_0 : i32, i32
  }
  func.func @transform_4(%arg0: i32) -> (i32, i32) {
    %c0_i32 = arith.constant 0 : i32
    %c0_i32_0 = arith.constant 0 : i32
    %c0_i32_1 = arith.constant 0 : i32
    return %c0_i32, %c0_i32_0 : i32, i32
  }
  func.func @transform_5(%arg0: i32) -> (i32, i32, i32) {
    %c0_i32 = arith.constant 0 : i32
    %c0_i32_0 = arith.constant 0 : i32
    %c0_i32_1 = arith.constant 0 : i32
    return %arg0, %c0_i32, %c0_i32_0 : i32, i32, i32
  }
}

</mosaic_0001>

<llo_original>
// kernel: tpu_custom_call.1
$region0: #{tpu_custom_call.1}
  #allocation0 [shape = 'u32[]', space=smem, size = 0x4, offset = 0x4, fixed_abs, tag = 'smem constant byte address 0x4 - core index']
  #allocation1 [shape = 'u32[144,128]{1,0:T(1,128)}', space=vmem, size = 0x12000, scoped, tag = 'internal scratch']
  %s0 = inlined_call_operand.vmem [shape: f32[2,64,32], index: 0, kind: input, shape index: {}]
  %s1 = inlined_call_operand.vmem [shape: bf16[80,64], index: 1, kind: input, shape index: {}]
  %s2 = inlined_call_operand.vmem [shape: bf16[64,80], index: 2, kind: input, shape index: {}]
  %s3 = inlined_call_operand.vmem [shape: f32[80,32], index: 3, kind: input, shape index: {}]
  %s4 = inlined_call_operand.vmem [shape: f32[80,32], index: 4, kind: input, shape index: {}]
  %s5 = inlined_call_operand.vmem [shape: f32[2,64,32], index: 5, kind: output, shape index: {}]
  %s6 = sld [smem:[#allocation0]]
  $region53: #{tpu_custom_call.1} parent=0
    _
  %s8 = ssub.s32 1, %s6
  %s9 = scalar_select 0, %s8, %s6
  loop: start=0, step=1, limit=4
  $region2: #{tpu_custom_call.1} parent=0 // loop_pre_header
    _
  $region3: #{tpu_custom_call.1} parent=0 // loop_header
    %s11 = sphi 0, %s15
    %p12 = scmp.ge.s32.totalorder %s11, 4
    %s21 = sphi 0, %s23
    %s24 = sphi 0, %s21
    %s25 = sphi 0, %s24
    %s41 = sphi 0, %s25
    %s45 = sphi 0, %s45
    %s47 = sphi 0, %s45
    %s48 = sphi 0, %s47
    %s62 = sphi 0, %s48
    %s66 = sphi 0, %s66
    %s68 = sphi 0, %s66
    %s69 = sphi 0, %s68
    %s83 = sphi 0, %s69
    %s87 = sphi 0, %s87
    %s89 = sphi 0, %s87
    %s90 = sphi 0, %s89
    %s104 = sphi 0, %s90
    %s108 = sphi 0, %s108
    %s110 = sphi 0, %s108
    %s111 = sphi 0, %s110
    %s125 = sphi 0, %s111
    %s131 = sphi 0, %s133
    %s134 = sphi 0, %s131
    %s135 = sphi 0, %s134
    %s151 = sphi 0, %s135
  $region4: #{tpu_custom_call.1} parent=0 // loop_header_branch
    %14 = sbr.rel (%p12) target = $region8
  $region5: #{tpu_custom_call.1} parent=0 // loop_body
    %s16 = ssub.s32 %s11, 1
    %s17 = ssub.s32 %s11, 2
    %s18 = sadd.s32 %s11, 1
    %s19 = ssub.s32 %s11, %s18
    %p20 = scmp.eq.s32.totalorder %s19, 0
    %s22 = sadd.s32 %s21, 1
    %s23 = scalar_select %p20, %s21, %s22
    %p26 = pneg %p20
    %p27 = scmp.eq.s32.totalorder %s11, 1
    %p28 = por %p26, %p27
    %p29 = scmp.ne.s32.totalorder %s21, %s24
    %p30 = scmp.eq.s32.totalorder %s11, 0
    %p31 = por %p29, %p30
    %p32 = scmp.ne.s32.totalorder %s21, %s24
    %p33 = scmp.eq.s32.totalorder %s16, 1
    %p34 = por %p32, %p33
    %p35 = scmp.ne.s32.totalorder %s24, %s25
    %p36 = scmp.eq.s32.totalorder %s16, 0
    %p37 = por %p35, %p36
    %p38 = scmp.ne.s32.totalorder %s24, %s25
    %p39 = scmp.eq.s32.totalorder %s17, 1
    %p40 = por %p38, %p39
    %p42 = scmp.ne.s32.totalorder %s25, %s41
    %p43 = scmp.eq.s32.totalorder %s17, 0
    %p44 = por %p42, %p43
    %s46 = sadd.s32 %s45, 1
    %p49 = scmp.eq.s32.totalorder %s11, 1
    %p50 = scmp.ne.s32.totalorder %s45, %s47
    %p51 = scmp.eq.s32.totalorder %s11, 0
    %p52 = por %p50, %p51
    %p53 = scmp.ne.s32.totalorder %s45, %s47
    %p54 = scmp.eq.s32.totalorder %s16, 1
    %p55 = por %p53, %p54
    %p56 = scmp.ne.s32.totalorder %s47, %s48
    %p57 = scmp.eq.s32.totalorder %s16, 0
    %p58 = por %p56, %p57
    %p59 = scmp.ne.s32.totalorder %s47, %s48
    %p60 = scmp.eq.s32.totalorder %s17, 1
    %p61 = por %p59, %p60
    %p63 = scmp.ne.s32.totalorder %s48, %s62
    %p64 = scmp.eq.s32.totalorder %s17, 0
    %p65 = por %p63, %p64
    %s67 = sadd.s32 %s66, 1
    %p70 = scmp.eq.s32.totalorder %s11, 1
    %p71 = scmp.ne.s32.totalorder %s66, %s68
    %p72 = scmp.eq.s32.totalorder %s11, 0
    %p73 = por %p71, %p72
    %p74 = scmp.ne.s32.totalorder %s66, %s68
    %p75 = scmp.eq.s32.totalorder %s16, 1
    %p76 = por %p74, %p75
    %p77 = scmp.ne.s32.totalorder %s68, %s69
    %p78 = scmp.eq.s32.totalorder %s16, 0
    %p79 = por %p77, %p78
    %p80 = scmp.ne.s32.totalorder %s68, %s69
    %p81 = scmp.eq.s32.totalorder %s17, 1
    %p82 = por %p80, %p81
    %p84 = scmp.ne.s32.totalorder %s69, %s83
    %p85 = scmp.eq.s32.totalorder %s17, 0
    %p86 = por %p84, %p85
    %s88 = sadd.s32 %s87, 1
    %p91 = scmp.eq.s32.totalorder %s11, 1
    %p92 = scmp.ne.s32.totalorder %s87, %s89
    %p93 = scmp.eq.s32.totalorder %s11, 0
    %p94 = por %p92, %p93
    %p95 = scmp.ne.s32.totalorder %s87, %s89
    %p96 = scmp.eq.s32.totalorder %s16, 1
    %p97 = por %p95, %p96
    %p98 = scmp.ne.s32.totalorder %s89, %s90
    %p99 = scmp.eq.s32.totalorder %s16, 0
    %p100 = por %p98, %p99
    %p101 = scmp.ne.s32.totalorder %s89, %s90
    %p102 = scmp.eq.s32.totalorder %s17, 1
    %p103 = por %p101, %p102
    %p105 = scmp.ne.s32.totalorder %s90, %s104
    %p106 = scmp.eq.s32.totalorder %s17, 0
    %p107 = por %p105, %p106
    %s109 = sadd.s32 %s108, 1
    %p112 = scmp.eq.s32.totalorder %s11, 1
    %p113 = scmp.ne.s32.totalorder %s108, %s110
    %p114 = scmp.eq.s32.totalorder %s11, 0
    %p115 = por %p113, %p114
    %p116 = scmp.ne.s32.totalorder %s108, %s110
    %p117 = scmp.eq.s32.totalorder %s16, 1
    %p118 = por %p116, %p117
    %p119 = scmp.ne.s32.totalorder %s110, %s111
    %p120 = scmp.eq.s32.totalorder %s16, 0
    %p121 = por %p119, %p120
    %p122 = scmp.ne.s32.totalorder %s110, %s111
    %p123 = scmp.eq.s32.totalorder %s17, 1
    %p124 = por %p122, %p123
    %p126 = scmp.ne.s32.totalorder %s111, %s125
    %p127 = scmp.eq.s32.totalorder %s17, 0
    %p128 = por %p126, %p127
    %s129 = ssub.s32 %s11, %s18
    %p130 = scmp.eq.s32.totalorder %s129, 0
    %s132 = sadd.s32 %s131, 1
    %s133 = scalar_select %p130, %s131, %s132
    %p136 = pneg %p130
    %p137 = scmp.eq.s32.totalorder %s11, 1
    %p138 = por %p136, %p137
    %p139 = scmp.ne.s32.totalorder %s131, %s134
    %p140 = scmp.eq.s32.totalorder %s11, 0
    %p141 = por %p139, %p140
    %p142 = scmp.ne.s32.totalorder %s131, %s134
    %p143 = scmp.eq.s32.totalorder %s16, 1
    %p144 = por %p142, %p143
    %p145 = scmp.ne.s32.totalorder %s134, %s135
    %p146 = scmp.eq.s32.totalorder %s16, 0
    %p147 = por %p145, %p146
    %p148 = scmp.ne.s32.totalorder %s134, %s135
    %p149 = scmp.eq.s32.totalorder %s17, 1
    %p150 = por %p148, %p149
    %p152 = scmp.ne.s32.totalorder %s135, %s151
    %p153 = scmp.eq.s32.totalorder %s17, 0
    %p154 = por %p152, %p153
    %p155 = scmp.le.s32.totalorder 1, %s11
    %p156 = scmp.lt.s32.totalorder %s11, 3
    %p157 = pnand %p155, %p156
    %p158 = pneg %p157
    // Predicated region
    $region9: #{tpu_custom_call.1} parent=5 // pred_check
      _
    $region10: #{tpu_custom_call.1} parent=5 // pred_check_branch
      %160 = sbr.rel (%p157) target = $region12
    $region11: #{tpu_custom_call.1} parent=5 // pred_region
      %s161 = ssub.s32 %s11, 1
      // Predicated region
      $region13: #{tpu_custom_call.1} parent=11 // pred_check
        %p162 = pneg %p58
      $region14: #{tpu_custom_call.1} parent=11 // pred_check_branch
        %164 = sbr.rel (%p162) target = $region16
      $region15: #{tpu_custom_call.1} parent=11 // pred_region
        _
      $region16: #{tpu_custom_call.1} parent=11 // pred_fallthru
        _
      // Predicated region
      $region17: #{tpu_custom_call.1} parent=11 // pred_check
        %p165 = pneg %p79
      $region18: #{tpu_custom_call.1} parent=11 // pred_check_branch
        %167 = sbr.rel (%p165) target = $region20
      $region19: #{tpu_custom_call.1} parent=11 // pred_region
        _
      $region20: #{tpu_custom_call.1} parent=11 // pred_fallthru
        _
      // Predicated region
      $region21: #{tpu_custom_call.1} parent=11 // pred_check
        %p168 = pneg %p100
      $region22: #{tpu_custom_call.1} parent=11 // pred_check_branch
        %170 = sbr.rel (%p168) target = $region24
      $region23: #{tpu_custom_call.1} parent=11 // pred_region
        _
      $region24: #{tpu_custom_call.1} parent=11 // pred_fallthru
        _
      // Predicated region
      $region25: #{tpu_custom_call.1} parent=11 // pred_check
        %p171 = pneg %p121
      $region26: #{tpu_custom_call.1} parent=11 // pred_check_branch
        %173 = sbr.rel (%p171) target = $region28
      $region27: #{tpu_custom_call.1} parent=11 // pred_region
        _
      $region28: #{tpu_custom_call.1} parent=11 // pred_fallthru
        _
    $region12: #{tpu_custom_call.1} parent=5 // pred_fallthru
      _
    %p174 = scmp.lt.s32.totalorder %s11, 2
    // Predicated region
    $region29: #{tpu_custom_call.1} parent=5 // pred_check
      %p175 = pneg %p174
    $region30: #{tpu_custom_call.1} parent=5 // pred_check_branch
      %177 = sbr.rel (%p175) target = $region32
    $region31: #{tpu_custom_call.1} parent=5 // pred_region
      // Predicated region
      $region33: #{tpu_custom_call.1} parent=31 // pred_check
        %p178 = pneg %p31
      $region34: #{tpu_custom_call.1} parent=31 // pred_check_branch
        %180 = sbr.rel (%p178) target = $region36
      $region35: #{tpu_custom_call.1} parent=31 // pred_region
        %p181 = scmp.lt.s32.totalorder %s11, 1
        %s182 = scalar_select %p181, %s11, 1
        %s183 = smul.addr %s182, 8
        %s184 = smul.addr %s183, 8
        %s185 = scalar_lea.vmem %s0, %s184
      $region36: #{tpu_custom_call.1} parent=31 // pred_fallthru
        _
    $region32: #{tpu_custom_call.1} parent=5 // pred_fallthru
      _
    %p186 = scmp.le.s32.totalorder 1, %s11
    %p187 = scmp.lt.s32.totalorder %s11, 3
    %p188 = pnand %p186, %p187
    %p189 = pneg %p188
    // Predicated region
    $region37: #{tpu_custom_call.1} parent=5 // pred_check
      _
    $region38: #{tpu_custom_call.1} parent=5 // pred_check_branch
      %191 = sbr.rel (%p188) target = $region40
    $region39: #{tpu_custom_call.1} parent=5 // pred_region
      %s192 = ssub.s32 %s11, 1
      %p193 = scmp.lt.s32.totalorder %s16, 1
      %s194 = scalar_select %p193, %s16, 1
      %s195 = smul.addr %s194, 8
      %s196 = smul.addr %s195, 8
      %s197 = scalar_lea.vmem %s0, %s196
      %p198 = pneg %p37
      %p199 = pneg %p34
      %p200 = pneg %p58
      %p201 = pneg %p55
      %p202 = pneg %p79
      %p203 = pneg %p76
      %p204 = pneg %p100
      %p205 = pneg %p97
      %p206 = pneg %p121
      %p207 = pneg %p118
      %p208 = pneg %p147
      %p209 = pneg %p144
      %p210 = scmp.lt.s32.totalorder %s16, 1
      %s211 = scalar_select %p210, %s16, 1
      %s212 = smul.addr %s211, 8
      %s213 = smul.addr %s212, 8
      %s214 = scalar_lea.vmem %s5, %s213
      %p215 = scmp.lt.s32.totalorder %s16, 1
      %s216 = scalar_select %p215, %s16, 1
      %s217 = smul.addr %s216, 8
      %s218 = smul.addr %s217, 8
      %s219 = scalar_lea.vmem %s0, %s218
      %p220 = scmp.lt.s32.totalorder %s16, 1
      %s221 = scalar_select %p220, %s16, 1
      %s222 = smul.addr %s221, 8
      %s223 = smul.addr %s222, 8
      %s224 = scalar_lea.vmem %s5, %s223
      %v226 = vld [vmem:[%s1] sm:$0xf]
      %v227 = vld [vmem:[%s1 + $0x4] sm:$0xf]
      %v228 = vld [vmem:[%s1 + $0x8] sm:$0xf]
      %v229 = vld [vmem:[%s1 + $0xc] sm:$0xf]
      %v230 = vld [vmem:[%s1 + $0x10] sm:$0xf]
      %v231 = vld [vmem:[%s1 + $0x14] sm:$0xf]
      %v232 = vld [vmem:[%s1 + $0x18] sm:$0xf]
      %v233 = vld [vmem:[%s1 + $0x1c] sm:$0xf]
      %v234 = vld [vmem:[%s1 + $0x20] sm:$0xf]
      %v235 = vld [vmem:[%s1 + $0x24] sm:$0xf]
      %v236 = vld [vmem:[%s2] sm:$0xf]
      %v237 = vld [vmem:[%s2 + $0x4] sm:$0xf]
      %v238 = vld [vmem:[%s2 + $0x8] sm:$0xf]
      %v239 = vld [vmem:[%s2 + $0xc] sm:$0xf]
      %v240 = vld [vmem:[%s2 + $0x10] sm:$0xf]
      %v241 = vld [vmem:[%s2 + $0x14] sm:$0xf]
      %v242 = vld [vmem:[%s2 + $0x18] sm:$0xf]
      %v243 = vld [vmem:[%s2 + $0x1c] sm:$0xf]
      %v244 = vld [vmem:[%s3] sm:$0xff]
      %v245 = vld [vmem:[%s3 + $0x8] sm:$0xff]
      %v246 = vld [vmem:[%s3 + $0x10] sm:$0xff]
      %v247 = vld [vmem:[%s3 + $0x18] sm:$0xff]
      %v248 = vld [vmem:[%s3 + $0x20] sm:$0xff]
      %v249 = vld [vmem:[%s3 + $0x28] sm:$0xff]
      %v250 = vld [vmem:[%s3 + $0x30] sm:$0xff]
      %v251 = vld [vmem:[%s3 + $0x38] sm:$0xff]
      %v252 = vld [vmem:[%s3 + $0x40] sm:$0xff]
      %v253 = vld [vmem:[%s3 + $0x48] sm:$0xff]
      %v254 = vld [vmem:[%s4] sm:$0xff]
      %v255 = vld [vmem:[%s4 + $0x8] sm:$0xff]
      %v256 = vld [vmem:[%s4 + $0x10] sm:$0xff]
      %v257 = vld [vmem:[%s4 + $0x18] sm:$0xff]
      %v258 = vld [vmem:[%s4 + $0x20] sm:$0xff]
      %v259 = vld [vmem:[%s4 + $0x28] sm:$0xff]
      %v260 = vld [vmem:[%s4 + $0x30] sm:$0xff]
      %v261 = vld [vmem:[%s4 + $0x38] sm:$0xff]
      %v262 = vld [vmem:[%s4 + $0x40] sm:$0xff]
      %v263 = vld [vmem:[%s4 + $0x48] sm:$0xff]
      %v264 = vld [vmem:[%s219] sm:$0xff]
      %v265 = vld [vmem:[%s219 + $0x8] sm:$0xff]
      %v266 = vld [vmem:[%s219 + $0x10] sm:$0xff]
      %v267 = vld [vmem:[%s219 + $0x18] sm:$0xff]
      %v268 = vld [vmem:[%s219 + $0x20] sm:$0xff]
      %v269 = vld [vmem:[%s219 + $0x28] sm:$0xff]
      %v270 = vld [vmem:[%s219 + $0x30] sm:$0xff]
      %v271 = vld [vmem:[%s219 + $0x38] sm:$0xff]
      %v272 = vpack.c.bf16 %v265, %v264
      %v273 = vpack.c.bf16 %v267, %v266
      %v274 = vpack.c.bf16 %v269, %v268
      %v275 = vpack.c.bf16 %v271, %v270
      %v286 = vunpack.c.l.b16 %v226
      %v287 = vunpack.c.l.b16 %v227
      %v288 = vunpack.c.l.b16 %v228
      %v289 = vunpack.c.l.b16 %v229
      %v290 = vunpack.c.l.b16 %v230
      %v291 = vunpack.c.l.b16 %v231
      %v292 = vunpack.c.l.b16 %v232
      %v293 = vunpack.c.l.b16 %v233
      %v294 = vunpack.c.l.b16 %v234
      %v295 = vunpack.c.l.b16 %v235
      %v296 = vpack.c.b16 %v287, %v286
      %v297 = vpack.c.b16 %v289, %v288
      %v298 = vpack.c.b16 %v291, %v290
      %v299 = vpack.c.b16 %v293, %v292
      %v300 = vpack.c.b16 %v295, %v294
      %vm301 = vcmask 523264
      %v303 = vsel %vm301, %v296, 0
      %v306 = vsel %vm301, %v297, 0
      %v309 = vsel %vm301, %v298, 0
      %v312 = vsel %vm301, %v299, 0
      %v315 = vsel %vm301, %v300, 0
      %317 = vmatprep.subr.bf16.mxu0 0
      %318 = vmatpush1.bf16.msra.mxu0 %v272
      %319 = vmatprep.subr.bf16.mxu0 0
      %320 = vmatpush1.bf16.msra.mxu0 %v273
      %321 = vmatprep.subr.bf16.mxu0 0
      %322 = vmatpush1.bf16.msra.mxu0 %v274
      %323 = vmatprep.subr.bf16.mxu0 0
      %324 = vmatpush1.bf16.msra.mxu0 %v275
      %325 = vmatprep.subr.bf16.mxu0 0
      %326 = vmatpush1.bf16.msra.mxu0 0
      %327 = vmatprep.subr.bf16.mxu0 0
      %328 = vmatpush1.bf16.msra.mxu0 0
      %329 = vmatprep.subr.bf16.mxu0 0
      %330 = vmatpush1.bf16.msra.mxu0 0
      %331 = vmatprep.subr.bf16.mxu0 0
      %332 = vmatpush1.bf16.msra.mxu0 0
      %333 = vmatprep.subr.bf16.mxu0 0
      %334 = vmatpush1.bf16.msra.mxu0 0
      %335 = vmatprep.subr.bf16.mxu0 0
      %336 = vmatpush1.bf16.msra.mxu0 0
      %337 = vmatprep.subr.bf16.mxu0 0
      %338 = vmatpush1.bf16.msra.mxu0 0
      %339 = vmatprep.subr.bf16.mxu0 0
      %340 = vmatpush1.bf16.msra.mxu0 0
      %341 = vmatprep.subr.bf16.mxu0 0
      %342 = vmatpush1.bf16.msra.mxu0 0
      %343 = vmatprep.subr.bf16.mxu0 0
      %344 = vmatpush1.bf16.msra.mxu0 0
      %345 = vmatprep.subr.bf16.mxu0 0
      %346 = vmatpush1.bf16.msra.mxu0 0
      %347 = vmatprep.subr.bf16.mxu0 0
      %348 = vmatpush1.bf16.msra.mxu0 0
      %349 = vmatprep.mubr.bf16.mxu0 0
      %350 = vmatmul.mubr.bf16.gmra.mrb[0].mxu0 %v303
      %v351 = vpop.f32.mrb[0].mxu0
      %v352 = vadd.f32 0.0, %v351
      %v353 = vpop.f32.mrb[0].mxu0
      %v354 = vpop.f32.mrb[0].mxu0
      %v355 = vadd.f32 0.0, %v354
      %v356 = vpop.f32.mrb[0].mxu0
      %357 = vmatprep.mubr.bf16.mxu0 0
      %358 = vmatmul.mubr.bf16.gmra.mrb[0].mxu0 %v306
      %v359 = vpop.f32.mrb[0].mxu0
      %v360 = vadd.f32 0.0, %v359
      %v361 = vpop.f32.mrb[0].mxu0
      %v362 = vpop.f32.mrb[0].mxu0
      %v363 = vadd.f32 0.0, %v362
      %v364 = vpop.f32.mrb[0].mxu0
      %365 = vmatprep.mubr.bf16.mxu0 0
      %366 = vmatmul.mubr.bf16.gmra.mrb[0].mxu0 %v309
      %v367 = vpop.f32.mrb[0].mxu0
      %v368 = vadd.f32 0.0, %v367
      %v369 = vpop.f32.mrb[0].mxu0
      %v370 = vpop.f32.mrb[0].mxu0
      %v371 = vadd.f32 0.0, %v370
      %v372 = vpop.f32.mrb[0].mxu0
      %373 = vmatprep.mubr.bf16.mxu0 0
      %374 = vmatmul.mubr.bf16.gmra.mrb[0].mxu0 %v312
      %v375 = vpop.f32.mrb[0].mxu0
      %v376 = vadd.f32 0.0, %v375
      %v377 = vpop.f32.mrb[0].mxu0
      %v378 = vpop.f32.mrb[0].mxu0
      %v379 = vadd.f32 0.0, %v378
      %v380 = vpop.f32.mrb[0].mxu0
      %381 = vmatprep.mubr.bf16.mxu0 0
      %382 = vmatmul.mubr.bf16.gmra.mrb[0].mxu0 %v315
      %v383 = vpop.f32.mrb[0].mxu0
      %v384 = vadd.f32 0.0, %v383
      %v385 = vpop.f32.mrb[0].mxu0
      %v386 = vpop.f32.mrb[0].mxu0
      %v387 = vadd.f32 0.0, %v386
      %v388 = vpop.f32.mrb[0].mxu0
      %389 = vdwg.mxu0
      %v390 = vmul.f32 %v352, %v244
      %v391 = vmul.f32 %v355, %v245
      %v392 = vmul.f32 %v360, %v246
      %v393 = vmul.f32 %v363, %v247
      %v394 = vmul.f32 %v368, %v248
      %v395 = vmul.f32 %v371, %v249
      %v396 = vmul.f32 %v376, %v250
      %v397 = vmul.f32 %v379, %v251
      %v398 = vmul.f32 %v384, %v252
      %v399 = vmul.f32 %v387, %v253
      %v400 = vmul.f32 %v371, %v254
      %v401 = vmul.f32 %v376, %v255
      %v402 = vmul.f32 %v379, %v256
      %v403 = vmul.f32 %v384, %v257
      %v404 = vmul.f32 %v387, %v258
      %v405 = vmul.f32 %v352, %v259
      %v406 = vmul.f32 %v355, %v260
      %v407 = vmul.f32 %v360, %v261
      %v408 = vmul.f32 %v363, %v262
      %v409 = vmul.f32 %v368, %v263
      %v410 = vadd.f32 %v390, %v400
      %v411 = vadd.f32 %v391, %v401
      %v412 = vadd.f32 %v392, %v402
      %v413 = vadd.f32 %v393, %v403
      %v414 = vadd.f32 %v394, %v404
      %v415 = vadd.f32 %v395, %v405
      %v416 = vadd.f32 %v396, %v406
      %v417 = vadd.f32 %v397, %v407
      %v418 = vadd.f32 %v398, %v408
      %v419 = vadd.f32 %v399, %v409
      %v420 = vpack.c.bf16 %v411, %v410
      %v421 = vpack.c.bf16 %v413, %v412
      %v422 = vpack.c.bf16 %v415, %v414
      %v423 = vpack.c.bf16 %v417, %v416
      %v424 = vpack.c.bf16 %v419, %v418
      %v433 = vunpack.c.l.b16 %v236
      %v434 = vunpack.c.l.b16 %v237
      %v435 = vunpack.c.l.b16 %v238
      %v436 = vunpack.c.l.b16 %v239
      %v437 = vunpack.c.l.b16 %v240
      %v438 = vunpack.c.l.b16 %v241
      %v439 = vunpack.c.l.b16 %v242
      %v440 = vunpack.c.l.b16 %v243
      %v441 = vpack.c.b16 %v434, %v433
      %v442 = vpack.c.b16 %v436, %v435
      %v443 = vpack.c.b16 %v438, %v437
      %v444 = vpack.c.b16 %v440, %v439
      %vm445 = vcmask 654336
      %v447 = vsel %vm445, %v441, 0
      %v450 = vsel %vm445, %v442, 0
      %v453 = vsel %vm445, %v443, 0
      %v456 = vsel %vm445, %v444, 0
      %458 = vmatprep.subr.bf16.mxu0 0
      %459 = vmatpush1.bf16.msra.mxu0 %v420
      %460 = vmatprep.subr.bf16.mxu0 0
      %461 = vmatpush1.bf16.msra.mxu0 %v421
      %462 = vmatprep.subr.bf16.mxu0 0
      %463 = vmatpush1.bf16.msra.mxu0 %v422
      %464 = vmatprep.subr.bf16.mxu0 0
      %465 = vmatpush1.bf16.msra.mxu0 %v423
      %466 = vmatprep.subr.bf16.mxu0 0
      %467 = vmatpush1.bf16.msra.mxu0 %v424
      %468 = vmatprep.subr.bf16.mxu0 0
      %469 = vmatpush1.bf16.msra.mxu0 0
      %470 = vmatprep.subr.bf16.mxu0 0
      %471 = vmatpush1.bf16.msra.mxu0 0
      %472 = vmatprep.subr.bf16.mxu0 0
      %473 = vmatpush1.bf16.msra.mxu0 0
      %474 = vmatprep.subr.bf16.mxu0 0
      %475 = vmatpush1.bf16.msra.mxu0 0
      %476 = vmatprep.subr.bf16.mxu0 0
      %477 = vmatpush1.bf16.msra.mxu0 0
      %478 = vmatprep.subr.bf16.mxu0 0
      %479 = vmatpush1.bf16.msra.mxu0 0
      %480 = vmatprep.subr.bf16.mxu0 0
      %481 = vmatpush1.bf16.msra.mxu0 0
      %482 = vmatprep.subr.bf16.mxu0 0
      %483 = vmatpush1.bf16.msra.mxu0 0
      %484 = vmatprep.subr.bf16.mxu0 0
      %485 = vmatpush1.bf16.msra.mxu0 0
      %486 = vmatprep.subr.bf16.mxu0 0
      %487 = vmatpush1.bf16.msra.mxu0 0
      %488 = vmatprep.subr.bf16.mxu0 0
      %489 = vmatpush1.bf16.msra.mxu0 0
      %490 = vmatprep.mubr.bf16.mxu0 0
      %491 = vmatmul.mubr.bf16.gmra.mrb[0].mxu0 %v447
      %v492 = vpop.f32.mrb[0].mxu0
      %v493 = vadd.f32 0.0, %v492
      %v494 = vpop.f32.mrb[0].mxu0
      %v495 = vpop.f32.mrb[0].mxu0
      %v496 = vadd.f32 0.0, %v495
      %v497 = vpop.f32.mrb[0].mxu0
      %498 = vmatprep.mubr.bf16.mxu0 0
      %499 = vmatmul.mubr.bf16.gmra.mrb[0].mxu0 %v450
      %v500 = vpop.f32.mrb[0].mxu0
      %v501 = vadd.f32 0.0, %v500
      %v502 = vpop.f32.mrb[0].mxu0
      %v503 = vpop.f32.mrb[0].mxu0
      %v504 = vadd.f32 0.0, %v503
      %v505 = vpop.f32.mrb[0].mxu0
      %506 = vmatprep.mubr.bf16.mxu0 0
      %507 = vmatmul.mubr.bf16.gmra.mrb[0].mxu0 %v453
      %v508 = vpop.f32.mrb[0].mxu0
      %v509 = vadd.f32 0.0, %v508
      %v510 = vpop.f32.mrb[0].mxu0
      %v511 = vpop.f32.mrb[0].mxu0
      %v512 = vadd.f32 0.0, %v511
      %v513 = vpop.f32.mrb[0].mxu0
      %514 = vmatprep.mubr.bf16.mxu0 0
      %515 = vmatmul.mubr.bf16.gmra.mrb[0].mxu0 %v456
      %v516 = vpop.f32.mrb[0].mxu0
      %v517 = vadd.f32 0.0, %v516
      %v518 = vpop.f32.mrb[0].mxu0
      %v519 = vpop.f32.mrb[0].mxu0
      %v520 = vadd.f32 0.0, %v519
      %v521 = vpop.f32.mrb[0].mxu0
      %522 = vdwg.mxu0
      %vm523 = vcmask 261120
      %524 = vst.msk [vmem:[%s224] sm:$0xff] %vm523, %v493
      %525 = vst.msk [vmem:[%s224 + $0x8] sm:$0xff] %vm523, %v496
      %526 = vst.msk [vmem:[%s224 + $0x10] sm:$0xff] %vm523, %v501
      %527 = vst.msk [vmem:[%s224 + $0x18] sm:$0xff] %vm523, %v504
      %528 = vst.msk [vmem:[%s224 + $0x20] sm:$0xff] %vm523, %v509
      %529 = vst.msk [vmem:[%s224 + $0x28] sm:$0xff] %vm523, %v512
      %530 = vst.msk [vmem:[%s224 + $0x30] sm:$0xff] %vm523, %v517
      %531 = vst.msk [vmem:[%s224 + $0x38] sm:$0xff] %vm523, %v520
      %p532 = scmp.lt.s32.totalorder %s16, 1
      %s533 = scalar_select %p532, %s16, 1
      %s534 = smul.addr %s533, 8
      %s535 = smul.addr %s534, 8
      %s536 = scalar_lea.vmem %s5, %s535
      // Predicated region
      $region41: #{tpu_custom_call.1} parent=39 // pred_check
        %p537 = pneg %p144
      $region42: #{tpu_custom_call.1} parent=39 // pred_check_branch
        %539 = sbr.rel (%p537) target = $region44
      $region43: #{tpu_custom_call.1} parent=39 // pred_region
        _
      $region44: #{tpu_custom_call.1} parent=39 // pred_fallthru
        _
    $region40: #{tpu_custom_call.1} parent=5 // pred_fallthru
      _
    %p540 = scmp.le.s32.totalorder 2, %s11
    // Predicated region
    $region45: #{tpu_custom_call.1} parent=5 // pred_check
      %p541 = pneg %p540
    $region46: #{tpu_custom_call.1} parent=5 // pred_check_branch
      %543 = sbr.rel (%p541) target = $region48
    $region47: #{tpu_custom_call.1} parent=5 // pred_region
      %s544 = ssub.s32 %s11, 2
      // Predicated region
      $region49: #{tpu_custom_call.1} parent=47 // pred_check
        %p545 = pneg %p150
      $region50: #{tpu_custom_call.1} parent=47 // pred_check_branch
        %547 = sbr.rel (%p545) target = $region52
      $region51: #{tpu_custom_call.1} parent=47 // pred_region
        %p548 = scmp.lt.s32.totalorder %s17, 1
        %s549 = scalar_select %p548, %s17, 1
        %s550 = smul.addr %s549, 8
        %s551 = smul.addr %s550, 8
        %s552 = scalar_lea.vmem %s5, %s551
      $region52: #{tpu_custom_call.1} parent=47 // pred_fallthru
        _
    $region48: #{tpu_custom_call.1} parent=5 // pred_fallthru
      _
  $region6: #{tpu_custom_call.1} parent=0 // loop_footer
    %s15 = sadd.s32 1, %s11
  $region7: #{tpu_custom_call.1} parent=0 // loop_footer_branch
    %10 = sbr.rel target = $region3
  $region8: #{tpu_custom_call.1} parent=0 // loop_exit
    _

</llo_original>
